<compile_context>
chip_gen: v7x
topology: tpu7x:2x2x1
jax: 0.10.0
libtpu: 0.0.40
codegen_flags: <defaults>
</compile_context>

<pallas_src>
import functools

import numpy as np
import jax
import jax.numpy as jnp
from jax.experimental import pallas as pl
from jax.experimental.pallas import tpu as pltpu

_MIB = 1024 * 1024


# ----------------------------------------------------------------------------
# Hardware probes (safe fallbacks if the query is unavailable)
# ----------------------------------------------------------------------------
def _vmem_capacity_bytes():
    try:
        info = pltpu.get_tpu_info()
        cap = int(getattr(info, "vmem_capacity_bytes", 0) or 0)
        if cap > 0:
            return cap
    except Exception:
        pass
    return 64 * _MIB  # conservative: v7x per-TensorCore VMEM


def _chip_has_bf16_eup():
    # v6e / v7x have bf16 VPU/EUP; v5e/v5p/v4 do not (bf16 exp would only add
    # casts there).  Conservative fallback: False.
    try:
        kind = jax.devices()[0].device_kind.lower()
    except Exception:
        return False
    return any(s in kind for s in ("v6", "v7", "tpu7"))


# ----------------------------------------------------------------------------
# Pallas kernel: masked, confidence-smoothed cross entropy (partial sums)
# ----------------------------------------------------------------------------
def _conf_ce_kernel(xlen_ref, tgt_ref, pred_ref, seq_ref, out_ref, acc_ref,
                    *, n_classes, tile_t, exp_dtype):
    c = pl.program_id(0)            # core-split index (time halves for v7x)
    b = pl.program_id(1)            # batch element
    t = pl.program_id(2)            # time tile within this core's share
    nt = pl.num_programs(2)

    @pl.when(t == 0)
    def _():
        acc_ref[...] = jnp.zeros_like(acc_ref)

    logits = pred_ref[...].astype(jnp.float32)        # (tile_t, C)
    seq = seq_ref[...].astype(jnp.float32)            # (tile_t, C)
    tgt = tgt_ref[...]                                 # (tile_t, 1) int32

    cid = jax.lax.broadcasted_iota(jnp.int32, logits.shape, 1)
    onehot = cid == tgt                                # (tile_t, C)

    # log_softmax(pred): only row stats + the gathered target value needed;
    # the full logp tensor is never materialized.
    m = jnp.max(logits, axis=-1, keepdims=True)
    z = logits - m
    ez = jnp.exp(z.astype(exp_dtype))                  # bf16 EUP on v6e/v7x
    lse = jnp.log(jnp.sum(ez.astype(jnp.float32), axis=-1, keepdims=True))
    z_t = jnp.sum(jnp.where(onehot, z, 0.0), axis=-1, keepdims=True)
    sum_z = jnp.sum(z, axis=-1, keepdims=True)

    # softmax(seq_pred)[target]: gather the logit BEFORE exponentiating, so a
    # single full-width exp (the denominator) remains; the numerator exp is a
    # skinny (tile_t, 1) column.
    ms = jnp.max(seq, axis=-1, keepdims=True)
    seq_t = jnp.sum(jnp.where(onehot, seq, 0.0), axis=-1, keepdims=True)
    es = jnp.exp((seq - ms).astype(exp_dtype))
    ses = jnp.sum(es.astype(jnp.float32), axis=-1, keepdims=True)
    es_t = jnp.exp(seq_t - ms)                         # (tile_t, 1) f32

    logp_t = z_t - lse                                 # logp at target class
    sum_logp = sum_z - jnp.float32(n_classes) * lse    # sum_c logp_c
    conf = es_t / ses      # one divide per row only; kept exact for parity
    smooth = (1.0 - conf) * (1.0 / (n_classes - 1))
    # sum_c true_dist_c * logp_c = smooth*sum_logp + (conf - smooth)*logp_t
    per = -(smooth * sum_logp + (conf - smooth) * logp_t)      # (tile_t, 1)

    # length mask: frames with global index >= x_len[b] (including padded /
    # OOB tail rows) contribute zero.  Must stay a select so NaN cannot leak.
    gt = c * nt + t
    row = jax.lax.broadcasted_iota(jnp.int32, (tile_t, 1), 0) + gt * tile_t
    valid = row < xlen_ref[b]
    acc_ref[...] += jnp.sum(jnp.where(valid, per, 0.0), axis=0, keepdims=True)

    @pl.when(t == nt - 1)
    def _():
        out_ref[...] = acc_ref[...].reshape(1, 1, 1, 1)


def conf_ce_loss_pallas(pred, seq_pred, target, x_len, *, tile_t=None,
                        vmem_budget_bytes=None, core_split=None,
                        pipeline_depth=2, use_bf16_exp=None):
    """pred/seq_pred: (T, B, C) f32 or bf16; target: (T, B) int; x_len: (B,)."""
    T, B, C = pred.shape
    assert seq_pred.shape == (T, B, C)
    assert target.shape == (T, B)

    in_itemsize = pred.dtype.itemsize
    cap = _vmem_capacity_bytes()
    if vmem_budget_bytes is None:
        vmem_budget_bytes = min(int(cap * 0.6), 96 * _MIB)
    vmem_limit_bytes = max(32 * _MIB, min(int(cap * 0.75), 96 * _MIB))

    if use_bf16_exp is None:
        use_bf16_exp = (pred.dtype == jnp.bfloat16) and _chip_has_bf16_eup()
    exp_dtype = jnp.bfloat16 if use_bf16_exp else jnp.float32

    # ---- tile sizing: count ALL live per-time-row bytes, hard-cap at 1024 --
    n_buf = max(2, int(pipeline_depth))
    lane_c = ((C + 127) // 128) * 128                  # physical lane width
    per_row = (n_buf * 2 * lane_c * in_itemsize        # pred + seq buffers
               + n_buf * 128 * 4                       # (tile_t,1) i32 target
               + 6 * lane_c * 4                        # full-width f32 temps
               + 8 * 128 * 4)                          # skinny f32 columns
    if tile_t is None:
        tile_t = min(vmem_budget_bytes // per_row, 1024)
    tile_t = int(tile_t)
    if tile_t >= T:
        tile_t = T                           # single block == full time extent
    else:
        tile_t = max(8, (tile_t // 8) * 8)   # sublane-aligned partial tiles
    grid_t = pl.cdiv(T, tile_t)

    # ---- megacore core-split (v7x) when B == 1 gives no batch parallelism --
    if core_split is None:
        core_split = 2 if (B == 1 and grid_t > 1) else 1
    cs = max(1, min(int(core_split), grid_t))
    grid_tc = pl.cdiv(grid_t, cs)
    pad_blocks = cs * grid_tc - grid_t

    def _tb(c, t):  # global time-block index (clamped if cs doesn't divide)
        if pad_blocks:
            return jnp.minimum(c * grid_tc + t, grid_t - 1)
        return c * grid_tc + t

    # ---- layouts ------------------------------------------------------------
    tgt3 = target.astype(jnp.int32).T.reshape(B, T, 1)
    xlen = x_len.astype(jnp.int32).reshape(B)
    pm = {} if n_buf == 2 else {"pipeline_mode": pl.Buffered(n_buf)}

    if C % 128 == 0:
        # Free contiguous flatten: a (tile_t, C) block at column-block b is
        # exactly batch b's class columns (time on sublanes, classes on lanes).
        pred_x = pred.reshape(T, B * C)
        seq_x = seq_pred.reshape(T, B * C)
        pred_spec = pl.BlockSpec((tile_t, C),
                                 lambda c, b, t, xl: (_tb(c, t), b), **pm)
        seq_spec = pl.BlockSpec((tile_t, C),
                                lambda c, b, t, xl: (_tb(c, t), b), **pm)
    else:
        # One-time transpose to (B, T, C): last block dim equals the full
        # class dim, so no 128-multiple constraint, no pad lanes, no in-kernel
        # pad masking, and the block DMA is fully contiguous.
        pred_x = jnp.transpose(pred, (1, 0, 2))
        seq_x = jnp.transpose(seq_pred, (1, 0, 2))
        pred_spec = pl.BlockSpec((pl.Squeezed(), tile_t, C),
                                 lambda c, b, t, xl: (b, _tb(c, t), 0), **pm)
        seq_spec = pl.BlockSpec((pl.Squeezed(), tile_t, C),
                                lambda c, b, t, xl: (b, _tb(c, t), 0), **pm)

    tgt_spec = pl.BlockSpec((pl.Squeezed(), tile_t, 1),
                            lambda c, b, t, xl: (b, _tb(c, t), 0))
    out_spec = pl.BlockSpec((1, 1, 1, 1), lambda c, b, t, xl: (c, b, 0, 0))

    kernel = functools.partial(_conf_ce_kernel, n_classes=C, tile_t=tile_t,
                               exp_dtype=exp_dtype)

    cost = pl.CostEstimate(
        flops=12 * T * B * C,
        transcendentals=2 * T * B * C,
        bytes_accessed=2 * T * B * C * in_itemsize + T * B * 4 + B * 4
                       + cs * B * 4)

    partial_sums = pl.pallas_call(
        kernel,
        out_shape=jax.ShapeDtypeStruct((cs, B, 1, 1), jnp.float32),
        grid_spec=pltpu.PrefetchScalarGridSpec(
            num_scalar_prefetch=1,                       # x_len -> SMEM
            grid=(cs, B, grid_tc),
            in_specs=[tgt_spec, pred_spec, seq_spec],
            out_specs=out_spec,
            scratch_shapes=[pltpu.VMEM((1, 1), jnp.float32)]),
        compiler_params=pltpu.CompilerParams(
            dimension_semantics=("parallel", "parallel", "arbitrary"),
            vmem_limit_bytes=vmem_limit_bytes),
        cost_estimate=cost,
    )(xlen, tgt3, pred_x, seq_x)

    # Mean over T*B including masked frames (matches the PyTorch reference).
    return jnp.sum(partial_sums) / jnp.float32(T * B)


# ----------------------------------------------------------------------------
# Host-side pseudo target generation (exact port of the torch.no_grad DP).
# TODO(synk): sequential backtracking DP with data-dependent lengths has no
#             clean Pallas equivalent; kept on host exactly as in PyTorch.
# ----------------------------------------------------------------------------
def gloss_max_probability_path(data, label):
    ninf = float('-inf')
    N, _ = data.shape
    R, Cn = len(label), N
    pb_max = np.zeros((R, Cn), dtype=float)
    path = [[(-1, -1) for _ in range(Cn)] for _ in range(R)]
    for i in range(R):
        pb_max[i, :] = data[:, label[i]]
        pb_max[i, 0:i] = ninf
        pb_max[i, Cn - R + i + 1:Cn] = ninf
    dp = np.zeros((R, Cn), dtype=float)
    dp[0, 0] = pb_max[0, 0]
    dp[1:R, 0] = ninf
    for i in range(1, Cn):
        dp[0, i] = dp[0, i - 1] + pb_max[0, i]
        path[0][i] = (0, i - 1)
    for i in range(1, R):
        for j in range(1, Cn):
            if dp[i - 1, j - 1] > dp[i, j - 1]:
                dp[i, j] = dp[i - 1, j - 1] + pb_max[i, j]
                path[i][j] = (i - 1, j - 1)
            else:
                dp[i, j] = dp[i, j - 1] + pb_max[i, j]
                path[i][j] = (i, j - 1)
    outcome = [label[R - 1]]
    back = path[R - 1][Cn - 1]
    while back != (-1, -1):
        outcome.append(label[back[0]])
        back = path[back[0]][back[1]]
    outcome.reverse()
    return outcome


def pseudo_gen(log_probs, label, x_len, label_len):
    T, B, _ = log_probs.shape
    pseudo = [
        gloss_max_probability_path(log_probs[:int(x_len[i]), i, :],
                                   list(label[i, :int(label_len[i])]))
        + [0] * (T - int(x_len[i]))
        for i in range(B)
    ]
    return np.asarray(pseudo, dtype=np.int32).T  # (T, B)


# ----------------------------------------------------------------------------
# Pure numpy reference of the forward pass (for correctness check)
# ----------------------------------------------------------------------------
def ref_loss(pred, seq_pred, target, x_len, C):
    pred = np.asarray(pred, np.float64)
    seq = np.asarray(seq_pred, np.float64)

    def logsoftmax(x):
        m = x.max(-1, keepdims=True)
        z = x - m
        return z - np.log(np.exp(z).sum(-1, keepdims=True))

    logp = logsoftmax(pred)
    sp = np.exp(logsoftmax(seq))
    tgt = np.asarray(target, np.int64)[..., None]
    conf = np.take_along_axis(sp, tgt, axis=2)[..., 0]
    smooth = (1.0 - conf) / (C - 1)
    true_dist = np.repeat(smooth[..., None], C, axis=2)
    np.put_along_axis(true_dist, tgt, conf[..., None], axis=2)
    mask = np.ones_like(pred)
    for i, ln in enumerate(np.asarray(x_len)):
        mask[int(ln):, i, :] = 0.0
    return float(np.mean(np.sum(-true_dist * logp * mask, axis=-1)))


if __name__ == "__main__":
    root = jax.random.PRNGKey(0)

    def run_case(key, T, B, C, x_len, label_len, **kw):
        k1, k2, k3 = jax.random.split(key, 3)
        pred = jax.random.normal(k1, (T, B, C), jnp.float32)
        seq_pred = jax.random.normal(k2, (T, B, C), jnp.float32)
        lmax = int(max(label_len))
        label = np.asarray(jax.random.randint(k3, (B, lmax), 1, C), np.int32)
        log_sp = np.asarray(jax.nn.log_softmax(seq_pred, axis=-1))
        target = pseudo_gen(log_sp, label, x_len, label_len)   # (T, B) int32
        ref = ref_loss(np.asarray(pred), np.asarray(seq_pred), target, x_len, C)
        loss = conf_ce_loss_pallas(pred, seq_pred, jnp.asarray(target),
                                   jnp.asarray(x_len), **kw)
        loss = float(jax.block_until_ready(loss))
        assert np.allclose(loss, ref, rtol=1e-4, atol=1e-4), (loss, ref, kw)
        return pred, seq_pred, target, ref

    # 1) multi-tile path with a masked partial tail tile (B=2, C=128).
    xl = np.array([40, 28], np.int32)
    ll = np.array([5, 3], np.int32)
    pred, seq_pred, target, ref = run_case(jax.random.fold_in(root, 1),
                                           40, 2, 128, xl, ll, tile_t=16)

    # 2) auto-sized tile (single block covering all of T), same data.
    loss2 = conf_ce_loss_pallas(pred, seq_pred, jnp.asarray(target),
                                jnp.asarray(xl))
    loss2 = float(jax.block_until_ready(loss2))
    assert np.allclose(loss2, ref, rtol=1e-4, atol=1e-4), (loss2, ref)

    # 3) bf16 inputs: halves HBM traffic; exp runs in bf16 only on bf16-EUP
    #    chips (v6e/v7x), f32 otherwise; compute stays f32 elsewhere.
    loss_bf16 = conf_ce_loss_pallas(pred.astype(jnp.bfloat16),
                                    seq_pred.astype(jnp.bfloat16),
                                    jnp.asarray(target), jnp.asarray(xl),
                                    tile_t=16)
    loss_bf16 = float(jax.block_until_ready(loss_bf16))
    assert np.allclose(loss_bf16, ref, rtol=5e-2, atol=5e-2), (loss_bf16, ref)

    # 4) C not a multiple of 128 -> transposed (B,T,C) layout, no lane padding.
    run_case(jax.random.fold_in(root, 2), 24, 2, 96,
             np.array([24, 17], np.int32), np.array([4, 3], np.int32),
             tile_t=8)

    # 5) B == 1 -> size-2 "parallel" core-split grid axis (v7x megacore).
    run_case(jax.random.fold_in(root, 3), 32, 1, 128,
             np.array([27], np.int32), np.array([4], np.int32), tile_t=8)

    print("KERNEL_OK")
</pallas_src>

<mosaic_0001>
module attributes {stable_mosaic.version = 11 : i64} {
  func.func @_conf_ce_kernel(%arg0: i32, %arg1: i32, %arg2: i32, %arg3: memref<2xi32, #tpu.memory_space<smem>>, %arg4: memref<1x16x1xi32, #tpu.memory_space<vmem>>, %arg5: memref<16x128xf32, #tpu.memory_space<vmem>>, %arg6: memref<16x128xf32, #tpu.memory_space<vmem>>, %arg7: memref<1x1x1x1xf32, #tpu.memory_space<vmem>>, %arg8: memref<1x1xf32, #tpu.memory_space<vmem>>) attributes {dimension_semantics = [#tpu.dimension_semantics<parallel>, #tpu.dimension_semantics<parallel>, #tpu.dimension_semantics<arbitrary>], iteration_bounds = array<i64: 1, 2, 3>, scalar_prefetch = 1 : i64, scratch_operands = 1 : i64, tpu.core_type = #tpu.core_type<tc>, window_params = [{transform_indices = @transform_0, window_bounds = array<i64: 1, 16, 1>}, {transform_indices = @transform_1, window_bounds = array<i64: 16, 128>}, {transform_indices = @transform_2, window_bounds = array<i64: 16, 128>}, {transform_indices = @transform_3, window_bounds = array<i64: 1, 1, 1, 1>}]} {
    %c0_i32 = arith.constant 0 : i32
    %0 = arith.cmpi eq, %arg2, %c0_i32 : i32
    %1 = arith.extui %0 : i1 to i32
    %c0_i32_0 = arith.constant 0 : i32
    %2 = arith.cmpi ne, %1, %c0_i32_0 : i32
    scf.if %2 {
      %cst_26 = arith.constant 0.000000e+00 : f32
      %72 = vector.broadcast %cst_26 : f32 to vector<1x1xf32>
      %c0_27 = arith.constant 0 : index
      %c0_28 = arith.constant 0 : index
      %73 = vector.load %arg8[%c0_27, %c0_28] : memref<1x1xf32, #tpu.memory_space<vmem>>, vector<1x1xf32>
      tpu.vector_store %arg8[%c0_27, %c0_28], %72 {strides = array<i32>} : memref<1x1xf32, #tpu.memory_space<vmem>>, vector<1x1xf32>,
    } else {
    }
    %c0 = arith.constant 0 : index
    %c0_1 = arith.constant 0 : index
    %3 = vector.load %arg5[%c0, %c0_1] : memref<16x128xf32, #tpu.memory_space<vmem>>, vector<16x128xf32>
    %c0_2 = arith.constant 0 : index
    %c0_3 = arith.constant 0 : index
    %4 = vector.load %arg6[%c0_2, %c0_3] : memref<16x128xf32, #tpu.memory_space<vmem>>, vector<16x128xf32>
    %c0_4 = arith.constant 0 : index
    %c0_5 = arith.constant 0 : index
    %c0_6 = arith.constant 0 : index
    %5 = vector.load %arg4[%c0_4, %c0_5, %c0_6] : memref<1x16x1xi32, #tpu.memory_space<vmem>>, vector<1x16x1xi32>
    %6 = vector.shape_cast %5 : vector<1x16x1xi32> to vector<16x1xi32>
    %7 = tpu.iota {dimensions = array<i32: 1>} : vector<16x128xi32>
    %8 = vector.broadcast %6 : vector<16x1xi32> to vector<16x128xi32>
    %9 = arith.cmpi eq, %7, %8 : vector<16x128xi32>
    %cst = arith.constant dense<0xFF800000> : vector<16xf32>
    %10 = vector.multi_reduction <maximumf>, %3, %cst [1] : vector<16x128xf32> to vector<16xf32>
    %11 = vector.shape_cast %10 : vector<16xf32> to vector<16x1xf32>
    %12 = vector.broadcast %11 : vector<16x1xf32> to vector<16x128xf32>
    %13 = arith.subf %3, %12 : vector<16x128xf32>
    %14 = math.exp %13 : vector<16x128xf32>
    %cst_7 = arith.constant dense<0.000000e+00> : vector<16xf32>
    %15 = vector.multi_reduction <add>, %14, %cst_7 [1] : vector<16x128xf32> to vector<16xf32>
    %16 = vector.shape_cast %15 : vector<16xf32> to vector<16x1xf32>
    %17 = math.log %16 : vector<16x1xf32>
    %cst_8 = arith.constant 0.000000e+00 : f32
    %18 = vector.broadcast %cst_8 : f32 to vector<16x128xf32>
    %19 = arith.select %9, %13, %18 : vector<16x128xi1>, vector<16x128xf32>
    %cst_9 = arith.constant dense<0.000000e+00> : vector<16xf32>
    %20 = vector.multi_reduction <add>, %19, %cst_9 [1] : vector<16x128xf32> to vector<16xf32>
    %21 = vector.shape_cast %20 : vector<16xf32> to vector<16x1xf32>
    %cst_10 = arith.constant dense<0.000000e+00> : vector<16xf32>
    %22 = vector.multi_reduction <add>, %13, %cst_10 [1] : vector<16x128xf32> to vector<16xf32>
    %23 = vector.shape_cast %22 : vector<16xf32> to vector<16x1xf32>
    %cst_11 = arith.constant dense<0xFF800000> : vector<16xf32>
    %24 = vector.multi_reduction <maximumf>, %4, %cst_11 [1] : vector<16x128xf32> to vector<16xf32>
    %25 = vector.shape_cast %24 : vector<16xf32> to vector<16x1xf32>
    %cst_12 = arith.constant 0.000000e+00 : f32
    %26 = vector.broadcast %cst_12 : f32 to vector<16x128xf32>
    %27 = arith.select %9, %4, %26 : vector<16x128xi1>, vector<16x128xf32>
    %cst_13 = arith.constant dense<0.000000e+00> : vector<16xf32>
    %28 = vector.multi_reduction <add>, %27, %cst_13 [1] : vector<16x128xf32> to vector<16xf32>
    %29 = vector.shape_cast %28 : vector<16xf32> to vector<16x1xf32>
    %30 = vector.broadcast %25 : vector<16x1xf32> to vector<16x128xf32>
    %31 = arith.subf %4, %30 : vector<16x128xf32>
    %32 = math.exp %31 : vector<16x128xf32>
    %cst_14 = arith.constant dense<0.000000e+00> : vector<16xf32>
    %33 = vector.multi_reduction <add>, %32, %cst_14 [1] : vector<16x128xf32> to vector<16xf32>
    %34 = vector.shape_cast %33 : vector<16xf32> to vector<16x1xf32>
    %35 = arith.subf %29, %25 : vector<16x1xf32>
    %36 = math.exp %35 : vector<16x1xf32>
    %37 = arith.subf %21, %17 : vector<16x1xf32>
    %cst_15 = arith.constant 1.280000e+02 : f32
    %38 = vector.broadcast %cst_15 : f32 to vector<16x1xf32>
    %39 = arith.mulf %38, %17 : vector<16x1xf32>
    %40 = arith.subf %23, %39 : vector<16x1xf32>
    %41 = arith.divf %36, %34 : vector<16x1xf32>
    %cst_16 = arith.constant 1.000000e+00 : f32
    %42 = vector.broadcast %cst_16 : f32 to vector<16x1xf32>
    %43 = arith.subf %42, %41 : vector<16x1xf32>
    %cst_17 = arith.constant 0.00787401571 : f32
    %44 = vector.broadcast %cst_17 : f32 to vector<16x1xf32>
    %45 = arith.mulf %43, %44 : vector<16x1xf32>
    %46 = arith.mulf %45, %40 : vector<16x1xf32>
    %47 = arith.subf %41, %45 : vector<16x1xf32>
    %48 = arith.mulf %47, %37 : vector<16x1xf32>
    %49 = arith.addf %46, %48 : vector<16x1xf32>
    %cst_18 = arith.constant 0.000000e+00 : f32
    %50 = vector.broadcast %cst_18 : f32 to vector<16x1xf32>
    %51 = arith.subf %50, %49 : vector<16x1xf32>
    %c3_i32 = arith.constant 3 : i32
    %52 = arith.muli %arg0, %c3_i32 : i32
    %53 = arith.addi %52, %arg2 : i32
    %54 = tpu.iota {dimensions = array<i32: 0>} : vector<16x1xi32>
    %c16_i32 = arith.constant 16 : i32
    %55 = arith.muli %53, %c16_i32 : i32
    %56 = vector.broadcast %55 : i32 to vector<16x1xi32>
    %57 = arith.addi %54, %56 : vector<16x1xi32>
    %58 = arith.index_cast %arg1 : i32 to index
    %59 = memref.load %arg3[%58] : memref<2xi32, #tpu.memory_space<smem>>
    %60 = vector.broadcast %59 : i32 to vector<16x1xi32>
    %61 = arith.cmpi slt, %57, %60 : vector<16x1xi32>
    %c0_19 = arith.constant 0 : index
    %c0_20 = arith.constant 0 : index
    %62 = vector.load %arg8[%c0_19, %c0_20] : memref<1x1xf32, #tpu.memory_space<vmem>>, vector<1x1xf32>
    %cst_21 = arith.constant 0.000000e+00 : f32
    %63 = vector.broadcast %cst_21 : f32 to vector<16x1xf32>
    %64 = arith.select %61, %51, %63 : vector<16x1xi1>, vector<16x1xf32>
    %cst_22 = arith.constant dense<0.000000e+00> : vector<1xf32>
    %65 = vector.multi_reduction <add>, %64, %cst_22 [0] : vector<16x1xf32> to vector<1xf32>
    %66 = vector.shape_cast %65 : vector<1xf32> to vector<1x1xf32>
    %67 = arith.addf %62, %66 : vector<1x1xf32>
    %c0_23 = arith.constant 0 : index
    %c0_24 = arith.constant 0 : index
    %68 = vector.load %arg8[%c0_23, %c0_24] : memref<1x1xf32, #tpu.memory_space<vmem>>, vector<1x1xf32>
    tpu.vector_store %arg8[%c0_23, %c0_24], %67 {strides = array<i32>} : memref<1x1xf32, #tpu.memory_space<vmem>>, vector<1x1xf32>,
    %c2_i32 = arith.constant 2 : i32
    %69 = arith.cmpi eq, %arg2, %c2_i32 : i32
    %70 = arith.extui %69 : i1 to i32
    %c0_i32_25 = arith.constant 0 : i32
    %71 = arith.cmpi ne, %70, %c0_i32_25 : i32
    scf.if %71 {
      %c0_26 = arith.constant 0 : index
      %c0_27 = arith.constant 0 : index
      %72 = vector.load %arg8[%c0_26, %c0_27] : memref<1x1xf32, #tpu.memory_space<vmem>>, vector<1x1xf32>
      %73 = vector.shape_cast %72 : vector<1x1xf32> to vector<1x1x1x1xf32>
      %c0_28 = arith.constant 0 : index
      %c0_29 = arith.constant 0 : index
      %c0_30 = arith.constant 0 : index
      %c0_31 = arith.constant 0 : index
      %74 = vector.load %arg7[%c0_28, %c0_29, %c0_30, %c0_31] : memref<1x1x1x1xf32, #tpu.memory_space<vmem>>, vector<1x1x1x1xf32>
      tpu.vector_store %arg7[%c0_28, %c0_29, %c0_30, %c0_31], %73 {strides = array<i32>} : memref<1x1x1x1xf32, #tpu.memory_space<vmem>>, vector<1x1x1x1xf32>,
    } else {
    }
    return
  }
  func.func @transform_0(%arg0: i32, %arg1: i32, %arg2: i32, %arg3: memref<2xi32, #tpu.memory_space<smem>>) -> (i32, i32, i32) {
    %c3_i32 = arith.constant 3 : i32
    %0 = arith.muli %arg0, %c3_i32 : i32
    %1 = arith.addi %0, %arg2 : i32
    %c0_i32 = arith.constant 0 : i32
    %c0_i32_0 = arith.constant 0 : i32
    return %arg1, %1, %c0_i32 : i32, i32, i32
  }
  func.func @transform_1(%arg0: i32, %arg1: i32, %arg2: i32, %arg3: memref<2xi32, #tpu.memory_space<smem>>) -> (i32, i32) {
    %c3_i32 = arith.constant 3 : i32
    %0 = arith.muli %arg0, %c3_i32 : i32
    %1 = arith.addi %0, %arg2 : i32
    %c0_i32 = arith.constant 0 : i32
    return %1, %arg1 : i32, i32
  }
  func.func @transform_2(%arg0: i32, %arg1: i32, %arg2: i32, %arg3: memref<2xi32, #tpu.memory_space<smem>>) -> (i32, i32) {
    %c3_i32 = arith.constant 3 : i32
    %0 = arith.muli %arg0, %c3_i32 : i32
    %1 = arith.addi %0, %arg2 : i32
    %c0_i32 = arith.constant 0 : i32
    return %1, %arg1 : i32, i32
  }
  func.func @transform_3(%arg0: i32, %arg1: i32, %arg2: i32, %arg3: memref<2xi32, #tpu.memory_space<smem>>) -> (i32, i32, i32, i32) {
    %c0_i32 = arith.constant 0 : i32
    %c0_i32_0 = arith.constant 0 : i32
    %c0_i32_1 = arith.constant 0 : i32
    return %arg0, %arg1, %c0_i32, %c0_i32_0 : i32, i32, i32, i32
  }
}

</mosaic_0001>

<llo_original>
// kernel: tpu_custom_call.1
$region0: #{tpu_custom_call.1}
  #allocation0 [shape = 'u32[]', space=smem, size = 0x4, offset = 0x4, fixed_abs, tag = 'smem constant byte address 0x4 - core index']
  #allocation1 [shape = 'u32[144,128]{1,0:T(1,128)}', space=vmem, size = 0x12000, scoped, tag = 'internal scratch']
  #allocation2 [shape = 'f32[1,1]{1,0:T(1,128)}', space=vmem, size = 0x200, scoped, tag = 'scratch operand']
  #allocation3 [shape = 's32[1]{0}', space=sflag, size = 0x4, scoped, tag = 'scoped memory for tpu_custom_call.1']
  #allocation4 [shape = 'u8[512]{0}', space=smem, size = 0x200, scoped, tag = 'prefetched SMEM operand 0']
  %s0 = inlined_call_operand.vmem [shape: s32[2], index: 0, kind: input, shape index: {}]
  %s1 = inlined_call_operand.vmem [shape: s32[2,40,1], index: 1, kind: input, shape index: {}]
  %s2 = inlined_call_operand.vmem [shape: f32[40,256], index: 2, kind: input, shape index: {}]
  %s3 = inlined_call_operand.hbm [shape: f32[40,256], index: 3, kind: input, shape index: {}]
  %s4 = inlined_call_operand.vmem [shape: f32[1,2,1,1], index: 4, kind: output, shape index: {}]
  %s5 = sld [smem:[#allocation0]]
  $region109: #{tpu_custom_call.1} parent=0
    _
  %s7 = ssub.s32 1, %s5
  %s8 = scalar_select 0, %s7, %s5
  %s9 = sshll.u32 %s0, 4
  %s10 = int_to_ptr.vmem [resolvable:$true] %s9
  %12 = dma.vmem_to_smem %s10, 16, [#allocation4], [#allocation3]
  %13 = dma.done [#allocation3], 16
  %14 = sfence
  $region1: #{tpu_custom_call.1} parent=0
    #allocation5 [shape = 'u8[16384]{0}', space=vmem, size = 0x4000, scoped, tag = 'input window, operand 2']
    #allocation6 [shape = 'u8[16384]{0}', space=vmem, size = 0x4000, scoped, tag = 'input window, operand 3']
    #allocation7 [shape = 's32[2]{0}', space=sflag, size = 0x8, scoped, tag = 'scoped memory for tpu_custom_call.1']
    %15 = vsyncpa [#allocation7], 0
    %s16 = scalar_lea.sflag [#allocation7], 1
    %17 = vsyncpa %s16, 0
    loop: start=0, step=1, limit=8
    $region2: #{tpu_custom_call.1} parent=1 // loop_pre_header
      _
    $region3: #{tpu_custom_call.1} parent=1 // loop_header
      %s19 = sphi 0, %s23
      %p20 = scmp.ge.s32.totalorder %s19, 8
      %s26 = sphi 0, %s45
      %s27 = sphi 0, %s41
      %s28 = sphi 0, %s37
      %s29 = sphi 0, %s26
      %s30 = sphi 0, %s27
      %s31 = sphi 0, %s28
      %s32 = sphi 0, %s29
      %s33 = sphi 0, %s30
      %s34 = sphi 0, %s31
      %s54 = sphi 0, %s56
      %s57 = sphi 0, %s54
      %s58 = sphi 0, %s57
      %s74 = sphi 0, %s58
      %s86 = sphi 0, %s88
      %s89 = sphi 0, %s86
      %s90 = sphi 0, %s89
      %s106 = sphi 0, %s90
      %s118 = sphi 0, %s120
      %s121 = sphi 0, %s118
      %s122 = sphi 0, %s121
      %s138 = sphi 0, %s122
      %s146 = sphi 0, %s148
      %s149 = sphi 0, %s146
      %s150 = sphi 0, %s149
      %s166 = sphi 0, %s150
    $region4: #{tpu_custom_call.1} parent=1 // loop_header_branch
      %22 = sbr.rel (%p20) target = $region8
    $region5: #{tpu_custom_call.1} parent=1 // loop_body
      %s24 = ssub.s32 %s19, 1
      %s25 = ssub.s32 %s19, 2
      %s35 = sadd.s32 1, %s28
      %p36 = scmp.ge.s32.totalorder %s35, 3
      %s37 = scalar_select %p36, 0, %s35
      %s38 = sadd.s32 1, %s27
      %s39 = scalar_select %p36, %s38, %s27
      %p40 = scmp.ge.s32.totalorder %s39, 2
      %s41 = scalar_select %p40, 0, %s39
      %s42 = sadd.s32 1, %s26
      %s43 = scalar_select %p40, %s42, %s26
      %p44 = scmp.ge.s32.totalorder %s43, 1
      %s45 = scalar_select %p44, 0, %s43
      %s46 = smul.u32 %s26, 3
      %s47 = sadd.s32 %s46, %s28
      %s48 = smul.u32 %s45, 3
      %s49 = sadd.s32 %s48, %s37
      %s50 = ssub.s32 %s27, %s41
      %s51 = ssub.s32 %s47, %s49
      %s52 = sor.u32 %s50, %s51
      %p53 = scmp.eq.s32.totalorder %s52, 0
      %s55 = sadd.s32 %s54, 1
      %s56 = scalar_select %p53, %s54, %s55
      %p59 = pneg %p53
      %p60 = scmp.eq.s32.totalorder %s19, 5
      %p61 = por %p59, %p60
      %p62 = scmp.ne.s32.totalorder %s54, %s57
      %p63 = scmp.eq.s32.totalorder %s19, 0
      %p64 = por %p62, %p63
      %p65 = scmp.ne.s32.totalorder %s54, %s57
      %p66 = scmp.eq.s32.totalorder %s24, 5
      %p67 = por %p65, %p66
      %p68 = scmp.ne.s32.totalorder %s57, %s58
      %p69 = scmp.eq.s32.totalorder %s24, 0
      %p70 = por %p68, %p69
      %p71 = scmp.ne.s32.totalorder %s57, %s58
      %p72 = scmp.eq.s32.totalorder %s25, 5
      %p73 = por %p71, %p72
      %p75 = scmp.ne.s32.totalorder %s58, %s74
      %p76 = scmp.eq.s32.totalorder %s25, 0
      %p77 = por %p75, %p76
      %s78 = smul.u32 %s26, 3
      %s79 = sadd.s32 %s78, %s28
      %s80 = smul.u32 %s45, 3
      %s81 = sadd.s32 %s80, %s37
      %s82 = ssub.s32 %s79, %s81
      %s83 = ssub.s32 %s27, %s41
      %s84 = sor.u32 %s82, %s83
      %p85 = scmp.eq.s32.totalorder %s84, 0
      %s87 = sadd.s32 %s86, 1
      %s88 = scalar_select %p85, %s86, %s87
      %p91 = pneg %p85
      %p92 = scmp.eq.s32.totalorder %s19, 5
      %p93 = por %p91, %p92
      %p94 = scmp.ne.s32.totalorder %s86, %s89
      %p95 = scmp.eq.s32.totalorder %s19, 0
      %p96 = por %p94, %p95
      %p97 = scmp.ne.s32.totalorder %s86, %s89
      %p98 = scmp.eq.s32.totalorder %s24, 5
      %p99 = por %p97, %p98
      %p100 = scmp.ne.s32.totalorder %s89, %s90
      %p101 = scmp.eq.s32.totalorder %s24, 0
      %p102 = por %p100, %p101
      %p103 = scmp.ne.s32.totalorder %s89, %s90
      %p104 = scmp.eq.s32.totalorder %s25, 5
      %p105 = por %p103, %p104
      %p107 = scmp.ne.s32.totalorder %s90, %s106
      %p108 = scmp.eq.s32.totalorder %s25, 0
      %p109 = por %p107, %p108
      %s110 = smul.u32 %s26, 3
      %s111 = sadd.s32 %s110, %s28
      %s112 = smul.u32 %s45, 3
      %s113 = sadd.s32 %s112, %s37
      %s114 = ssub.s32 %s111, %s113
      %s115 = ssub.s32 %s27, %s41
      %s116 = sor.u32 %s114, %s115
      %p117 = scmp.eq.s32.totalorder %s116, 0
      %s119 = sadd.s32 %s118, 1
      %s120 = scalar_select %p117, %s118, %s119
      %p123 = pneg %p117
      %p124 = scmp.eq.s32.totalorder %s19, 5
      %p125 = por %p123, %p124
      %p126 = scmp.ne.s32.totalorder %s118, %s121
      %p127 = scmp.eq.s32.totalorder %s19, 0
      %p128 = por %p126, %p127
      %p129 = scmp.ne.s32.totalorder %s118, %s121
      %p130 = scmp.eq.s32.totalorder %s24, 5
      %p131 = por %p129, %p130
      %p132 = scmp.ne.s32.totalorder %s121, %s122
      %p133 = scmp.eq.s32.totalorder %s24, 0
      %p134 = por %p132, %p133
      %p135 = scmp.ne.s32.totalorder %s121, %s122
      %p136 = scmp.eq.s32.totalorder %s25, 5
      %p137 = por %p135, %p136
      %p139 = scmp.ne.s32.totalorder %s122, %s138
      %p140 = scmp.eq.s32.totalorder %s25, 0
      %p141 = por %p139, %p140
      %s142 = ssub.s32 %s26, %s45
      %s143 = ssub.s32 %s27, %s41
      %s144 = sor.u32 %s142, %s143
      %p145 = scmp.eq.s32.totalorder %s144, 0
      %s147 = sadd.s32 %s146, 1
      %s148 = scalar_select %p145, %s146, %s147
      %p151 = pneg %p145
      %p152 = scmp.eq.s32.totalorder %s19, 5
      %p153 = por %p151, %p152
      %p154 = scmp.ne.s32.totalorder %s146, %s149
      %p155 = scmp.eq.s32.totalorder %s19, 0
      %p156 = por %p154, %p155
      %p157 = scmp.ne.s32.totalorder %s146, %s149
      %p158 = scmp.eq.s32.totalorder %s24, 5
      %p159 = por %p157, %p158
      %p160 = scmp.ne.s32.totalorder %s149, %s150
      %p161 = scmp.eq.s32.totalorder %s24, 0
      %p162 = por %p160, %p161
      %p163 = scmp.ne.s32.totalorder %s149, %s150
      %p164 = scmp.eq.s32.totalorder %s25, 5
      %p165 = por %p163, %p164
      %p167 = scmp.ne.s32.totalorder %s150, %s166
      %p168 = scmp.eq.s32.totalorder %s25, 0
      %p169 = por %p167, %p168
      %p170 = scmp.le.s32.totalorder 1, %s19
      %p171 = scmp.lt.s32.totalorder %s19, 7
      %p172 = pnand %p170, %p171
      %p173 = pneg %p172
      // Predicated region
      $region9: #{tpu_custom_call.1} parent=5 // pred_check
        _
      $region10: #{tpu_custom_call.1} parent=5 // pred_check_branch
        %175 = sbr.rel (%p172) target = $region12
      $region11: #{tpu_custom_call.1} parent=5 // pred_region
        %s176 = ssub.s32 %s19, 1
      $region12: #{tpu_custom_call.1} parent=5 // pred_fallthru
        _
      %p177 = scmp.lt.s32.totalorder %s19, 6
      // Predicated region
      $region13: #{tpu_custom_call.1} parent=5 // pred_check
        %p178 = pneg %p177
      $region14: #{tpu_custom_call.1} parent=5 // pred_check_branch
        %180 = sbr.rel (%p178) target = $region16
      $region15: #{tpu_custom_call.1} parent=5 // pred_region
        // Predicated region
        $region17: #{tpu_custom_call.1} parent=15 // pred_check
          %p181 = pneg %p64
        $region18: #{tpu_custom_call.1} parent=15 // pred_check_branch
          %183 = sbr.rel (%p181) target = $region20
        $region19: #{tpu_custom_call.1} parent=15 // pred_region
          %s184 = smul.u32 %s26, 3
          %s185 = sadd.s32 %s184, %s28
          %s186 = smul.u32 2, %s185
          %s187 = ssub.s32 5, %s186
          %p188 = scmp.lt.s32.totalorder %s187, 2
          %s189 = scalar_select %p188, %s187, 2
          %s190 = smul.u32 128, %s189
          %p191 = scmp.lt.s32.totalorder %s27, 1
          %s192 = scalar_select %p191, %s27, 1
          %p193 = scmp.lt.s32.totalorder %s186, 4
          %s194 = scalar_select %p193, %s186, 4
          %s195 = smul.addr %s192, 5
          %s196 = sadd.s32 %s194, %s195
          %s197 = smul.addr %s196, 8
          %s198 = scalar_lea.vmem %s1, %s197
          %s199 = smul.u32 %s26, 3
          %s200 = sadd.s32 %s199, %s28
          %s201 = smul.u32 2, %s200
          %s202 = ssub.s32 5, %s201
          %p203 = scmp.lt.s32.totalorder %s202, 2
          %s204 = scalar_select %p203, %s202, 2
          %s205 = smul.u32 128, %s204
        $region20: #{tpu_custom_call.1} parent=15 // pred_fallthru
          _
        // Predicated region
        $region21: #{tpu_custom_call.1} parent=15 // pred_check
          %p206 = pneg %p96
        $region22: #{tpu_custom_call.1} parent=15 // pred_check_branch
          %208 = sbr.rel (%p206) target = $region24
        $region23: #{tpu_custom_call.1} parent=15 // pred_region
          %s209 = sand.u32 %s86, 1
          %s210 = sand.u32 %s86, 1
          %s211 = smul.addr %s210, 16
          %s212 = scalar_lea.vmem [#allocation5], %s211
          %s213 = smul.u32 %s26, 3
          %s214 = sadd.s32 %s213, %s28
          %s215 = smul.u32 2, %s214
          %s216 = ssub.s32 5, %s215
          %p217 = scmp.lt.s32.totalorder %s216, 2
          %s218 = scalar_select %p217, %s216, 2
          %s219 = smul.u32 128, %s218
          %p220 = scmp.ne.s32.totalorder 0, %s219
          %s221 = smul.addr %s215, 2
          %s222 = sadd.s32 %s27, %s221
          %s223 = smul.addr %s222, 8
          %s224 = scalar_lea.vmem %s2, %s223
          // Predicated region
          $region25: #{tpu_custom_call.1} parent=23 // pred_check
            %p225 = pneg %p220
          $region26: #{tpu_custom_call.1} parent=23 // pred_check_branch
            %227 = sbr.rel (%p225) target = $region28
          $region27: #{tpu_custom_call.1} parent=23 // pred_region
            // Predicated region
            $region29: #{tpu_custom_call.1} parent=27 // pred_check
              _
            $region30: #{tpu_custom_call.1} parent=27 // pred_check_branch
              %229 = sbr.rel (0) target = $region32
            $region31: #{tpu_custom_call.1} parent=27 // pred_region
              // Predicated region
              $region51: #{tpu_custom_call.1} parent=31 // pred_check
                _
              $region52: #{tpu_custom_call.1} parent=31 // pred_check_branch
                %280 = sbr.rel (0) target = $region54
              $region53: #{tpu_custom_call.1} parent=31 // pred_region
                %s281 = sshrl.u32 %s218, 1
                // While loop
                $region55: #{tpu_custom_call.1} parent=53 // loop_pre_header
                  _
                $region56: #{tpu_custom_call.1} parent=53 // loop_header
                  %s283 = sphi 0, %s285
                  %p284 = scmp.ge.s32.totalorder %s283, %s281
                  %s288 = sphi 0, %s297
                  %s289 = sphi %s224, %s300
                  %s290 = sphi %s212, %s301
                $region57: #{tpu_custom_call.1} parent=53 // loop_header_branch
                  %287 = sbr.rel (%p284) target = $region61
                $region58: #{tpu_custom_call.1} parent=53 // loop_body
                  %v291 = vld [vmem:[%s289] sm:$0xff]
                  %292 = vst [vmem:[%s290] sm:$0xff] %v291
                  %v293 = vld [vmem:[%s289 + $0x10] sm:$0xff]
                  %294 = vst [vmem:[%s290 + $0x8] sm:$0xff] %v293
                  %s295 = sadd.s32 1, %s288
                  %p296 = scmp.ge.s32.totalorder %s295, %s281
                  %s297 = scalar_select %p296, 0, %s295
                  %s298 = smul.u32 %s297, 32
                  %s299 = smul.u32 %s297, 16
                  %s300 = scalar_lea.vmem %s224, %s298
                  %s301 = scalar_lea.vmem %s212, %s299 [#allocation5]
                $region59: #{tpu_custom_call.1} parent=53 // loop_footer
                  %s285 = sadd.s32 %s283, 1
                $region60: #{tpu_custom_call.1} parent=53 // loop_footer_branch
                  %282 = sbr.rel target = $region56
                $region61: #{tpu_custom_call.1} parent=53 // loop_exit
                  _
                %s302 = sshrl.u32 %s218, 1
                %s303 = sand.u32 %s218, 1
                %s304 = smul.u32 %s302, 2
                %s305 = smul.u32 16, %s304
                %s306 = scalar_lea.vmem %s224, %s305
                %s307 = smul.u32 8, %s304
                %s308 = scalar_lea.vmem %s212, %s307 [#allocation5]
                // While loop
                $region62: #{tpu_custom_call.1} parent=53 // loop_pre_header
                  _
                $region63: #{tpu_custom_call.1} parent=53 // loop_header
                  %s310 = sphi 0, %s312
                  %p311 = scmp.ge.s32.totalorder %s310, %s303
                  %s315 = sphi 0, %s322
                  %s316 = sphi %s306, %s325
                  %s317 = sphi %s308, %s326
                $region64: #{tpu_custom_call.1} parent=53 // loop_header_branch
                  %314 = sbr.rel (%p311) target = $region68
                $region65: #{tpu_custom_call.1} parent=53 // loop_body
                  %v318 = vld [vmem:[%s316] sm:$0xff]
                  %319 = vst [vmem:[%s317] sm:$0xff] %v318
                  %s320 = sadd.s32 1, %s315
                  %p321 = scmp.ge.s32.totalorder %s320, %s303
                  %s322 = scalar_select %p321, 0, %s320
                  %s323 = smul.u32 %s322, 16
                  %s324 = smul.u32 %s322, 8
                  %s325 = scalar_lea.vmem %s306, %s323
                  %s326 = scalar_lea.vmem %s308, %s324 [#allocation5]
                $region66: #{tpu_custom_call.1} parent=53 // loop_footer
                  %s312 = sadd.s32 %s310, 1
                $region67: #{tpu_custom_call.1} parent=53 // loop_footer_branch
                  %309 = sbr.rel target = $region63
                $region68: #{tpu_custom_call.1} parent=53 // loop_exit
                  _
              $region54: #{tpu_custom_call.1} parent=31 // pred_fallthru
                _
              // Predicated region
              $region69: #{tpu_custom_call.1} parent=31 // pred_check
                _
              $region70: #{tpu_custom_call.1} parent=31 // pred_check_branch
                %328 = sbr.rel target = $region72
              $region71: #{tpu_custom_call.1} parent=31 // pred_region
                _
              $region72: #{tpu_custom_call.1} parent=31 // pred_fallthru
                _
            $region32: #{tpu_custom_call.1} parent=27 // pred_fallthru
              _
            // Predicated region
            $region33: #{tpu_custom_call.1} parent=27 // pred_check
              _
            $region34: #{tpu_custom_call.1} parent=27 // pred_check_branch
              %231 = sbr.rel target = $region36
            $region35: #{tpu_custom_call.1} parent=27 // pred_region
              %s233 = sshrl.u32 %s218, 1
              // While loop
              $region37: #{tpu_custom_call.1} parent=35 // loop_pre_header
                _
              $region38: #{tpu_custom_call.1} parent=35 // loop_header
                %s235 = sphi 0, %s237
                %p236 = scmp.ge.s32.totalorder %s235, %s233
                %s240 = sphi 0, %s249
                %s241 = sphi %s224, %s252
                %s242 = sphi %s212, %s253
              $region39: #{tpu_custom_call.1} parent=35 // loop_header_branch
                %239 = sbr.rel (%p236) target = $region43
              $region40: #{tpu_custom_call.1} parent=35 // loop_body
                %v243 = vld [vmem:[%s241] sm:$0xff]
                %244 = vst [vmem:[%s242] sm:$0xff] %v243
                %v245 = vld [vmem:[%s241 + $0x10] sm:$0xff]
                %246 = vst [vmem:[%s242 + $0x8] sm:$0xff] %v245
                %s247 = sadd.s32 1, %s240
                %p248 = scmp.ge.s32.totalorder %s247, %s233
                %s249 = scalar_select %p248, 0, %s247
                %s250 = smul.u32 %s249, 32
                %s251 = smul.u32 %s249, 16
                %s252 = scalar_lea.vmem %s224, %s250
                %s253 = scalar_lea.vmem %s212, %s251 [#allocation5]
              $region41: #{tpu_custom_call.1} parent=35 // loop_footer
                %s237 = sadd.s32 %s235, 1
              $region42: #{tpu_custom_call.1} parent=35 // loop_footer_branch
                %234 = sbr.rel target = $region38
              $region43: #{tpu_custom_call.1} parent=35 // loop_exit
                _
              %s254 = sshrl.u32 %s218, 1
              %s255 = sand.u32 %s218, 1
              %s256 = smul.u32 %s254, 2
              %s257 = smul.u32 16, %s256
              %s258 = scalar_lea.vmem %s224, %s257
              %s259 = smul.u32 8, %s256
              %s260 = scalar_lea.vmem %s212, %s259 [#allocation5]
              // While loop
              $region44: #{tpu_custom_call.1} parent=35 // loop_pre_header
                _
              $region45: #{tpu_custom_call.1} parent=35 // loop_header
                %s262 = sphi 0, %s264
                %p263 = scmp.ge.s32.totalorder %s262, %s255
                %s267 = sphi 0, %s274
                %s268 = sphi %s258, %s277
                %s269 = sphi %s260, %s278
              $region46: #{tpu_custom_call.1} parent=35 // loop_header_branch
                %266 = sbr.rel (%p263) target = $region50
              $region47: #{tpu_custom_call.1} parent=35 // loop_body
                %v270 = vld [vmem:[%s268] sm:$0xff]
                %271 = vst [vmem:[%s269] sm:$0xff] %v270
                %s272 = sadd.s32 1, %s267
                %p273 = scmp.ge.s32.totalorder %s272, %s255
                %s274 = scalar_select %p273, 0, %s272
                %s275 = smul.u32 %s274, 16
                %s276 = smul.u32 %s274, 8
                %s277 = scalar_lea.vmem %s258, %s275
                %s278 = scalar_lea.vmem %s260, %s276 [#allocation5]
              $region48: #{tpu_custom_call.1} parent=35 // loop_footer
                %s264 = sadd.s32 %s262, 1
              $region49: #{tpu_custom_call.1} parent=35 // loop_footer_branch
                %261 = sbr.rel target = $region45
              $region50: #{tpu_custom_call.1} parent=35 // loop_exit
                _
            $region36: #{tpu_custom_call.1} parent=27 // pred_fallthru
              _
          $region28: #{tpu_custom_call.1} parent=23 // pred_fallthru
            _
          %329 = vnop
        $region24: #{tpu_custom_call.1} parent=15 // pred_fallthru
          _
        // Predicated region
        $region73: #{tpu_custom_call.1} parent=15 // pred_check
          %p330 = pneg %p128
        $region74: #{tpu_custom_call.1} parent=15 // pred_check_branch
          %332 = sbr.rel (%p330) target = $region76
        $region75: #{tpu_custom_call.1} parent=15 // pred_region
          %s333 = sand.u32 %s118, 1
          %s334 = scalar_lea.sflag [#allocation7], %s333
          %s335 = sand.u32 %s118, 1
          %s336 = smul.addr %s335, 16
          %s337 = scalar_lea.vmem [#allocation6], %s336
          %s338 = smul.u32 %s26, 3
          %s339 = sadd.s32 %s338, %s28
          %s340 = smul.u32 2, %s339
          %s341 = ssub.s32 5, %s340
          %p342 = scmp.lt.s32.totalorder %s341, 2
          %s343 = scalar_select %p342, %s341, 2
          %s344 = smul.u32 128, %s343
          %s346 = ssub.s32 256, %s344
          %347 = vsyncadd %s334, %s346
          %p348 = scmp.ne.s32.totalorder 0, %s344
          %s349 = smul.addr %s340, 2
          %s350 = sadd.s32 %s27, %s349
          %s351 = smul.addr %s350, 128
          %s352 = scalar_lea.hbm %s3, %s351
          %s353 = smul.u32 8, %s343
          %s354 = sshll.u32 %s337, 4
          %s355 = int_to_ptr.vmem [resolvable:$true] %s354
          %s356 = sshll.u32 %s353, 4
          %360 = dma.hbm_to_vmem [thread:$0]  (%p348), %s352, %s356, %s355, %s334, 256, 128, 8
        $region76: #{tpu_custom_call.1} parent=15 // pred_fallthru
          _
      $region16: #{tpu_custom_call.1} parent=5 // pred_fallthru
        _
      %p361 = scmp.le.s32.totalorder 1, %s19
      %p362 = scmp.lt.s32.totalorder %s19, 7
      %p363 = pnand %p361, %p362
      %p364 = pneg %p363
      // Predicated region
      $region77: #{tpu_custom_call.1} parent=5 // pred_check
        _
      $region78: #{tpu_custom_call.1} parent=5 // pred_check_branch
        %366 = sbr.rel (%p363) target = $region80
      $region79: #{tpu_custom_call.1} parent=5 // pred_region
        %s367 = ssub.s32 %s19, 1
        %s368 = sand.u32 %s89, 1
        %s369 = sand.u32 %s89, 1
        %s370 = smul.addr %s369, 16
        %s371 = scalar_lea.vmem [#allocation5], %s370
        // Predicated region
        $region81: #{tpu_custom_call.1} parent=79 // pred_check
          %p372 = pneg %p102
        $region82: #{tpu_custom_call.1} parent=79 // pred_check_branch
          %374 = sbr.rel (%p372) target = $region84
        $region83: #{tpu_custom_call.1} parent=79 // pred_region
          _
        $region84: #{tpu_custom_call.1} parent=79 // pred_fallthru
          _
        %s375 = sand.u32 %s121, 1
        %s376 = scalar_lea.sflag [#allocation7], %s375
        %s377 = sand.u32 %s121, 1
        %s378 = smul.addr %s377, 16
        %s379 = scalar_lea.vmem [#allocation6], %s378
        // Predicated region
        $region85: #{tpu_custom_call.1} parent=79 // pred_check
          %p380 = pneg %p134
        $region86: #{tpu_custom_call.1} parent=79 // pred_check_branch
          %382 = sbr.rel (%p380) target = $region88
        $region87: #{tpu_custom_call.1} parent=79 // pred_region
          %383 = dma.done %s376, 256
        $region88: #{tpu_custom_call.1} parent=79 // pred_fallthru
          _
        %s384 = smul.u32 %s29, 3
        %s385 = sadd.s32 %s384, %s31
        %s386 = smul.u32 2, %s385
        %s387 = ssub.s32 5, %s386
        %p388 = scmp.lt.s32.totalorder %s387, 2
        %s389 = scalar_select %p388, %s387, 2
        %s390 = smul.u32 128, %s389
        %p391 = scmp.lt.s32.totalorder %s30, 1
        %s392 = scalar_select %p391, %s30, 1
        %p393 = scmp.lt.s32.totalorder %s386, 4
        %s394 = scalar_select %p393, %s386, 4
        %s395 = smul.addr %s392, 5
        %s396 = sadd.s32 %s394, %s395
        %s397 = smul.addr %s396, 8
        %s398 = scalar_lea.vmem %s1, %s397
        %p399 = pneg %p70
        %p400 = pneg %p67
        %s401 = sand.u32 %s89, 1
        %s402 = sand.u32 %s89, 1
        %s403 = smul.addr %s402, 16
        %s404 = scalar_lea.vmem [#allocation5], %s403
        %p405 = pneg %p102
        %p406 = pneg %p99
        %s407 = sand.u32 %s121, 1
        %s408 = scalar_lea.sflag [#allocation7], %s407
        %s409 = sand.u32 %s121, 1
        %s410 = smul.addr %s409, 16
        %s411 = scalar_lea.vmem [#allocation6], %s410
        %p412 = pneg %p134
        %p413 = pneg %p131
        %p414 = pneg %p162
        %p415 = pneg %p159
        %p416 = scmp.lt.s32.totalorder %s29, 0
        %s417 = scalar_select %p416, %s29, 0
        %p418 = scmp.lt.s32.totalorder %s30, 1
        %s419 = scalar_select %p418, %s30, 1
        %s420 = smul.addr %s417, 2
        %s421 = sadd.s32 %s419, %s420
        %s422 = scalar_lea.vmem %s4, %s421
        %s423 = smul.u32 %s29, 3
        %s424 = sadd.s32 %s423, %s31
        %s425 = smul.u32 2, %s424
        %s426 = ssub.s32 5, %s425
        %p427 = scmp.lt.s32.totalorder %s426, 2
        %s428 = scalar_select %p427, %s426, 2
        %s429 = smul.u32 128, %s428
        %p430 = scmp.lt.s32.totalorder %s30, 1
        %s431 = scalar_select %p430, %s30, 1
        %p432 = scmp.lt.s32.totalorder %s425, 4
        %s433 = scalar_select %p432, %s425, 4
        %s434 = smul.addr %s431, 5
        %s435 = sadd.s32 %s433, %s434
        %s436 = smul.addr %s435, 8
        %s437 = scalar_lea.vmem %s1, %s436
        %s438 = smul.u32 %s29, 3
        %s439 = sadd.s32 %s438, %s31
        %s440 = smul.u32 2, %s439
        %s441 = ssub.s32 5, %s440
        %p442 = scmp.lt.s32.totalorder %s441, 2
        %s443 = scalar_select %p442, %s441, 2
        %s444 = smul.u32 128, %s443
        %s445 = smul.u32 %s29, 3
        %s446 = sadd.s32 %s445, %s31
        %s447 = smul.u32 2, %s446
        %s448 = ssub.s32 5, %s447
        %p449 = scmp.lt.s32.totalorder %s448, 2
        %s450 = scalar_select %p449, %s448, 2
        %s451 = smul.u32 128, %s450
        %s452 = smul.u32 %s29, 3
        %s453 = sadd.s32 %s452, %s31
        %s454 = smul.u32 2, %s453
        %s455 = ssub.s32 5, %s454
        %p456 = scmp.lt.s32.totalorder %s455, 2
        %s457 = scalar_select %p456, %s455, 2
        %s458 = smul.u32 128, %s457
        %p459 = scmp.lt.s32.totalorder %s29, 0
        %s460 = scalar_select %p459, %s29, 0
        %p461 = scmp.lt.s32.totalorder %s30, 1
        %s462 = scalar_select %p461, %s30, 1
        %s463 = smul.addr %s460, 2
        %s464 = sadd.s32 %s462, %s463
        %s465 = scalar_lea.vmem %s4, %s464
        %p466 = scmp.eq.s32.totalorder %s31, 0
        // Predicated region
        $region89: #{tpu_custom_call.1} parent=79 // pred_check
          %p467 = pneg %p466
        $region90: #{tpu_custom_call.1} parent=79 // pred_check_branch
          %469 = sbr.rel (%p467) target = $region92
        $region91: #{tpu_custom_call.1} parent=79 // pred_region
          %vm470 = vcmask 0
          %471 = vst.msk [vmem:[#allocation2] sm:$0x1] %vm470, 0.0
        $region92: #{tpu_custom_call.1} parent=79 // pred_fallthru
          _
        %v472 = vld [vmem:[%s371] sm:$0xff]
        %v473 = vld [vmem:[%s371 + $0x8] sm:$0xff]
        %v474 = vld [vmem:[%s379] sm:$0xff]
        %v475 = vld [vmem:[%s379 + $0x8] sm:$0xff]
        %v476 = vld [vmem:[%s437] sm:$0xff]
        %v477 = vld [vmem:[%s437 + $0x8] sm:$0xff]
        %v478 = vlaneseq
        %v479 = vand.u32 %v478, 127
        %480 = vset.pattern.permute.xlu0 0
        %481 = vperm.xlu0 %480, %v476
        %v482 = vpop.permute.xlu0 %481
        %483 = vset.pattern.permute.xlu0 0
        %484 = vperm.xlu0 %483, %v477
        %v485 = vpop.permute.xlu0 %484
        %vm486 = vcmp.eq.s32.totalorder %v479, %v482
        %vm487 = vcmp.eq.s32.totalorder %v479, %v485
        %488 = vmax.xlane.f32.xlu0 %v472
        %v489 = vpop.xlane.xlu0 %488
        %490 = vmax.xlane.f32.xlu0 %v473
        %v491 = vpop.xlane.xlu0 %490
        %v492 = vsub.f32 %v472, %v489
        %v493 = vsub.f32 %v473, %v491
        %v494 = vmul.f32 %v492, 1.442695
        %v495 = vpow.pop %v494
        %v496 = vmul.f32 %v493, 1.442695
        %v497 = vpow.pop %v496
        %498 = vadd.xlane.f32.xlu0 %v495
        %v499 = vpop.xlane.xlu0 %498
        %500 = vadd.xlane.f32.xlu0 %v497
        %v501 = vpop.xlane.xlu0 %500
        %v502 = vlog2.pop %v499
        %v503 = vmul.f32 %v502, 0.6931472
        %v504 = vlog2.pop %v501
        %v505 = vmul.f32 %v504, 0.6931472
        %v506 = vsel %vm486, %v492, 0.0
        %v507 = vsel %vm487, %v493, 0.0
        %508 = vadd.xlane.f32.xlu0 %v506
        %v509 = vpop.xlane.xlu0 %508
        %510 = vadd.xlane.f32.xlu0 %v507
        %v511 = vpop.xlane.xlu0 %510
        %512 = vadd.xlane.f32.xlu0 %v492
        %v513 = vpop.xlane.xlu0 %512
        %514 = vadd.xlane.f32.xlu0 %v493
        %v515 = vpop.xlane.xlu0 %514
        %516 = vmax.xlane.f32.xlu0 %v474
        %v517 = vpop.xlane.xlu0 %516
        %518 = vmax.xlane.f32.xlu0 %v475
        %v519 = vpop.xlane.xlu0 %518
        %v520 = vsel %vm486, %v474, 0.0
        %v521 = vsel %vm487, %v475, 0.0
        %522 = vadd.xlane.f32.xlu0 %v520
        %v523 = vpop.xlane.xlu0 %522
        %524 = vadd.xlane.f32.xlu0 %v521
        %v525 = vpop.xlane.xlu0 %524
        %v526 = vsub.f32 %v474, %v517
        %v527 = vsub.f32 %v475, %v519
        %v528 = vmul.f32 %v526, 1.442695
        %v529 = vpow.pop %v528
        %v530 = vmul.f32 %v527, 1.442695
        %v531 = vpow.pop %v530
        %532 = vadd.xlane.f32.xlu0 %v529
        %v533 = vpop.xlane.xlu0 %532
        %534 = vadd.xlane.f32.xlu0 %v531
        %v535 = vpop.xlane.xlu0 %534
        %v536 = vsub.f32 %v523, %v517
        %v537 = vsub.f32 %v525, %v519
        %v538 = vmul.f32 %v536, 1.442695
        %v539 = vpow.pop %v538
        %v540 = vmul.f32 %v537, 1.442695
        %v541 = vpow.pop %v540
        %v542 = vsub.f32 %v509, %v503
        %v543 = vsub.f32 %v511, %v505
        %v544 = vmul.f32 %v503, 128.0
        %v545 = vmul.f32 %v505, 128.0
        %v546 = vsub.f32 %v513, %v544
        %v547 = vsub.f32 %v515, %v545
        %v548 = vrcp.pop %v533
        %v549 = vmul.f32 %v539, %v548
        %v550 = vrcp.pop %v535
        %v551 = vmul.f32 %v541, %v550
        %v552 = vsub.f32 1.0, %v549
        %v553 = vsub.f32 1.0, %v551
        %v554 = vmul.f32 %v552, 0.007874016
        %v555 = vmul.f32 %v553, 0.007874016
        %v556 = vmul.f32 %v554, %v546
        %v557 = vmul.f32 %v555, %v547
        %v558 = vsub.f32 %v549, %v554
        %v559 = vsub.f32 %v551, %v555
        %v560 = vmul.f32 %v558, %v542
        %v561 = vmul.f32 %v559, %v543
        %v562 = vadd.f32 %v556, %v560
        %v563 = vadd.f32 %v557, %v561
        %v564 = vsub.f32 0.0, %v562
        %v565 = vsub.f32 0.0, %v563
        %s566 = smul.u32 %s29, 3
        %s567 = sadd.s32 %s566, %s31
        %v568 = vlaneseq
        %v569 = vshrl.u32 %v568, 7
        %v570 = vadd.s32 %v569, 8
        %s571 = smul.u32 %s567, 16
        %v572 = vstv %s571
        %v573 = vadd.s32 %v569, %v572
        %v574 = vadd.s32 %v570, %v572
        %s575 = sld [smem:[#allocation4 + %s30]]
        %v576 = vstv %s575
        %vm577 = vcmp.lt.s32.totalorder %v573, %v576
        %vm578 = vcmp.lt.s32.totalorder %v574, %v576
        %v579 = vld [vmem:[#allocation2] sm:$0x1]
        %v580 = vsel %vm577, %v564, 0.0
        %v581 = vsel %vm578, %v565, 0.0
        %v582 = vadd.f32 %v580, %v581
        %v583 = vrot.slane %v582, 4
        %v584 = vadd.f32 %v582, %v583
        %v585 = vrot.slane %v584, 2
        %v586 = vadd.f32 %v584, %v585
        %v587 = vrot.slane %v586, 1
        %v588 = vadd.f32 %v586, %v587
        %v589 = vadd.f32 %v579, %v588
        %vm590 = vcmask 0
        %591 = vst.msk [vmem:[#allocation2] sm:$0x1] %vm590, %v589
        %p592 = scmp.eq.s32.totalorder %s31, 2
        // Predicated region
        $region93: #{tpu_custom_call.1} parent=79 // pred_check
          %p593 = pneg %p592
        $region94: #{tpu_custom_call.1} parent=79 // pred_check_branch
          %595 = sbr.rel (%p593) target = $region96
        $region95: #{tpu_custom_call.1} parent=79 // pred_region
          %v596 = vld [vmem:[#allocation2] sm:$0x1]
          %597 = vst.msk [vmem:[%s465] sm:$0x1] %vm590, %v596
        $region96: #{tpu_custom_call.1} parent=79 // pred_fallthru
          _
        %p598 = scmp.lt.s32.totalorder %s29, 0
        %s599 = scalar_select %p598, %s29, 0
        %p600 = scmp.lt.s32.totalorder %s30, 1
        %s601 = scalar_select %p600, %s30, 1
        %s602 = smul.addr %s599, 2
        %s603 = sadd.s32 %s601, %s602
        %s604 = scalar_lea.vmem %s4, %s603
        // Predicated region
        $region97: #{tpu_custom_call.1} parent=79 // pred_check
          %p605 = pneg %p159
        $region98: #{tpu_custom_call.1} parent=79 // pred_check_branch
          %607 = sbr.rel (%p605) target = $region100
        $region99: #{tpu_custom_call.1} parent=79 // pred_region
          _
        $region100: #{tpu_custom_call.1} parent=79 // pred_fallthru
          _
      $region80: #{tpu_custom_call.1} parent=5 // pred_fallthru
        _
      %p608 = scmp.le.s32.totalorder 2, %s19
      // Predicated region
      $region101: #{tpu_custom_call.1} parent=5 // pred_check
        %p609 = pneg %p608
      $region102: #{tpu_custom_call.1} parent=5 // pred_check_branch
        %611 = sbr.rel (%p609) target = $region104
      $region103: #{tpu_custom_call.1} parent=5 // pred_region
        %s612 = ssub.s32 %s19, 2
        // Predicated region
        $region105: #{tpu_custom_call.1} parent=103 // pred_check
          %p613 = pneg %p165
        $region106: #{tpu_custom_call.1} parent=103 // pred_check_branch
          %615 = sbr.rel (%p613) target = $region108
        $region107: #{tpu_custom_call.1} parent=103 // pred_region
          %p616 = scmp.lt.s32.totalorder %s32, 0
          %s617 = scalar_select %p616, %s32, 0
          %p618 = scmp.lt.s32.totalorder %s33, 1
          %s619 = scalar_select %p618, %s33, 1
          %s620 = smul.addr %s617, 2
          %s621 = sadd.s32 %s619, %s620
          %s622 = scalar_lea.vmem %s4, %s621
        $region108: #{tpu_custom_call.1} parent=103 // pred_fallthru
          _
      $region104: #{tpu_custom_call.1} parent=5 // pred_fallthru
        _
    $region6: #{tpu_custom_call.1} parent=1 // loop_footer
      %s23 = sadd.s32 1, %s19
    $region7: #{tpu_custom_call.1} parent=1 // loop_footer_branch
      %18 = sbr.rel target = $region3
    $region8: #{tpu_custom_call.1} parent=1 // loop_exit
      _
    %623 = vsyncpa [#allocation7], 1
    %s624 = scalar_lea.sflag [#allocation7], 1
    %625 = vsyncpa %s624, 1

</llo_original>
